<compile_context>
chip_gen: v5e
topology: v5e:2x2
jax: 0.10.0
libtpu: 0.0.40
codegen_flags: <defaults>
</compile_context>

<pallas_src>
import jax
import jax.numpy as jnp
from jax.experimental import pallas as pl
from jax.experimental.pallas import tpu as pltpu

EPS = 1e-5


def _round_up(n, m=8):
    return ((n + m - 1) // m) * m


def make_dense_block_kernel(num_convs, c0_pad, g_pad, H, W, S):
    """Whole DenseBlock in channel-major (C, N*H*W) layout, channels 8-aligned."""
    taps = [(ky - 1, kx - 1) for ky in range(3) for kx in range(3)]

    def kernel(*refs):
        x_ref, mask_ref = refs[0], refs[1]                    # (c0_pad,S), (9,S)
        param_refs = refs[2:2 + 4 * num_convs]                # (w2d,b,gamma,beta)*
        o_ref = refs[2 + 4 * num_convs]                       # (c_out_pad, S)

        masks = mask_ref[...]                                 # precomputed on host

        # Stage the (already padded) input into its fixed rows of the output
        # buffer; all later reads/writes are 8-aligned sublane slices (no concat
        # of the running activation).
        o_ref[0:c0_pad, :] = x_ref[...]

        cin = c0_pad
        for i in range(num_convs):
            w_ref, b_ref, g_ref, be_ref = param_refs[4 * i:4 * i + 4]
            x_in = o_ref[0:cin, :]                            # (cin, S) VMEM-resident

            # ---- BatchNorm2d (training-mode batch stats), ONE pass, folded to
            #      per-channel scale/shift, fused with ReLU. ----
            mean = jnp.mean(x_in, axis=1, keepdims=True)      # (cin, 1)
            ex2 = jnp.mean(x_in * x_in, axis=1, keepdims=True)
            var = jnp.maximum(ex2 - mean * mean, 0.0)         # clamp before rsqrt
            scale = g_ref[...] * jax.lax.rsqrt(var + EPS)
            shift = be_ref[...] - mean * scale
            xn = jnp.maximum(x_in * scale + shift, 0.0)       # (cin, S)

            # ---- Conv2d 3x3, pad=1, as ONE im2col matmul on the MXU.
            #      Each tap: XLU lane rotate (pltpu.roll) + halo mask. ----
            patch_rows = []
            for t, (dy, dx) in enumerate(taps):
                delta = dy * W + dx
                if delta == 0:
                    patch_rows.append(xn)                     # center tap, mask == 1
                else:
                    shifted = pltpu.roll(xn, (-delta) % S, axis=1)
                    patch_rows.append(shifted * masks[t:t + 1, :])
            patches = jnp.concatenate(patch_rows, axis=0)     # (9*cin, S), 8-aligned
            y = jnp.dot(w_ref[...], patches,
                        preferred_element_type=jnp.float32)   # (g_pad, S)
            y = y + b_ref[...]                                 # (g_pad, 1) bcast

            # Dense connection: write the new channels into their fixed rows.
            o_ref[cin:cin + g_pad, :] = y
            cin += g_pad

    return kernel


def make_dense_block(params, input_channels, num_channels, N, H, W):
    """Host-side packing (8-aligned channel padding, matmul weight layout, halo
    masks) + a jitted forward fn: x_nchw -> y_nchw."""
    num_convs = len(params)
    c0, growth = input_channels, num_channels
    c0_pad, g_pad = _round_up(c0), _round_up(growth)
    S = N * H * W
    c_out = c0 + num_convs * growth
    c_out_pad = c0_pad + num_convs * g_pad

    # Halo-validity masks for the 9 conv taps, built ONCE on the host.
    flat = jnp.arange(S, dtype=jnp.int32)
    yy = (flat // W) % H
    xx = flat % W
    mask_rows = []
    for ky in range(3):
        for kx in range(3):
            dy, dx = ky - 1, kx - 1
            mask_rows.append(((yy + dy >= 0) & (yy + dy < H) &
                              (xx + dx >= 0) & (xx + dx < W)).astype(jnp.float32))
    masks = jnp.stack(mask_rows, axis=0)                      # (9, S)

    # Padded channel layout: group 0 (input) -> rows [0, c0_pad); block j output
    # -> rows [c0_pad + j*g_pad, +g_pad). Pad channels get zero weights / gamma /
    # beta / bias so they stay exactly zero through every block.
    packed = []
    for i, (w, b, gamma, beta) in enumerate(params):          # w: HWIO (3,3,cin,growth)
        cin_pad = c0_pad + i * g_pad
        w_pad = jnp.zeros((3, 3, cin_pad, g_pad), jnp.float32)
        gamma_pad = jnp.zeros((cin_pad, 1), jnp.float32)
        beta_pad = jnp.zeros((cin_pad, 1), jnp.float32)
        # group 0 (original input channels)
        w_pad = w_pad.at[:, :, 0:c0, 0:growth].set(w[:, :, 0:c0, :])
        gamma_pad = gamma_pad.at[0:c0, 0].set(gamma[0:c0])
        beta_pad = beta_pad.at[0:c0, 0].set(beta[0:c0])
        # previous blocks' output groups
        for j in range(i):
            dst = c0_pad + j * g_pad
            src = c0 + j * growth
            w_pad = w_pad.at[:, :, dst:dst + growth, 0:growth].set(
                w[:, :, src:src + growth, :])
            gamma_pad = gamma_pad.at[dst:dst + growth, 0].set(gamma[src:src + growth])
            beta_pad = beta_pad.at[dst:dst + growth, 0].set(beta[src:src + growth])
        # column index = (ky*3 + kx)*cin_pad + c  — matches the kernel's tap order.
        w2d = jnp.transpose(w_pad, (3, 0, 1, 2)).reshape(g_pad, 9 * cin_pad)
        b_pad = jnp.zeros((g_pad, 1), jnp.float32).at[0:growth, 0].set(b)
        packed.append((w2d, b_pad, gamma_pad, beta_pad))

    kernel = make_dense_block_kernel(num_convs, c0_pad, g_pad, H, W, S)
    flat_params = [p for blk in packed for p in blk]

    @jax.jit
    def forward(x_nchw):
        # TODO(synk): in a full DenseNet keep activations channel-major across
        # adjacent blocks so these NCHW<->(C, N*H*W) relayouts disappear.
        x_cm = jnp.transpose(x_nchw, (1, 0, 2, 3)).reshape(c0, S).astype(jnp.float32)
        x_cm = jnp.pad(x_cm, ((0, c0_pad - c0), (0, 0)))
        flat_inputs = [x_cm, masks] + flat_params
        out_pad = pl.pallas_call(
            kernel,
            out_shape=jax.ShapeDtypeStruct((c_out_pad, S), jnp.float32),
            grid=(1,),
            in_specs=[pl.BlockSpec(a.shape, lambda i: (0, 0)) for a in flat_inputs],
            out_specs=pl.BlockSpec((c_out_pad, S), lambda i: (0, 0)),
            compiler_params=pltpu.CompilerParams(
                dimension_semantics=("arbitrary",)),
            # TODO(synk): at real resolutions add a 'parallel' spatial grid axis
            # (with a separate BN-stats pass feeding scale/shift via scalar
            # prefetch) to use v7x's 2nd TensorCore and retile against its
            # 64 MiB VMEM; irrelevant at 40x256 f32 (~40 KB).
        )(*flat_inputs)
        # Strip pad channels and return NCHW.
        pieces = [out_pad[0:c0]]
        for j in range(num_convs):
            lo = c0_pad + j * g_pad
            pieces.append(out_pad[lo:lo + growth])
        out_cm = jnp.concatenate(pieces, axis=0)              # (c_out, S)
        return jnp.transpose(out_cm.reshape(c_out, N, H, W), (1, 0, 2, 3))

    return forward


def init_dense_block(key, num_convs, input_channels, num_channels):
    """Deterministic synthetic parameters (shapes match the PyTorch module)."""
    params = []
    for i in range(num_convs):
        cin = input_channels + i * num_channels
        key, kw, kb = jax.random.split(key, 3)
        w = jax.random.normal(kw, (3, 3, cin, num_channels), jnp.float32) * 0.1
        b = jax.random.normal(kb, (num_channels,), jnp.float32) * 0.1
        gamma = jnp.ones((cin,), jnp.float32)    # BN weight init = 1
        beta = jnp.zeros((cin,), jnp.float32)    # BN bias init = 0
        params.append((w, b, gamma, beta))
    return params


# ---------------- pure-JAX reference (for the correctness check) ----------------
def conv_block_ref(x_nchw, w, b, gamma, beta):
    mean = jnp.mean(x_nchw, axis=(0, 2, 3), keepdims=True)
    var = jnp.mean((x_nchw - mean) ** 2, axis=(0, 2, 3), keepdims=True)
    g = gamma.reshape(1, -1, 1, 1)
    bt = beta.reshape(1, -1, 1, 1)
    xn = (x_nchw - mean) * jax.lax.rsqrt(var + EPS) * g + bt
    xn = jnp.maximum(xn, 0.0)
    w_oihw = jnp.transpose(w, (3, 2, 0, 1))
    y = jax.lax.conv_general_dilated(
        xn, w_oihw, window_strides=(1, 1), padding=((1, 1), (1, 1)),
        dimension_numbers=("NCHW", "OIHW", "NCHW"))
    return y + b.reshape(1, -1, 1, 1)


def dense_block_ref(x_nchw, params):
    x = x_nchw
    for (w, b, gamma, beta) in params:
        y = conv_block_ref(x, w, b, gamma, beta)
        x = jnp.concatenate([x, y], axis=1)
    return x


if __name__ == "__main__":
    key = jax.random.PRNGKey(0)
    kx, kp = jax.random.split(key)

    # DenseBlock(num_convs=2, input_channels=3, num_channels=10), X ~ (4,3,8,8)
    x = jax.random.normal(kx, (4, 3, 8, 8), jnp.float32)
    params = init_dense_block(kp, num_convs=2, input_channels=3, num_channels=10)

    forward = make_dense_block(params, input_channels=3, num_channels=10,
                               N=4, H=8, W=8)
    out = jax.block_until_ready(forward(x))

    ref = dense_block_ref(x, params)
    assert out.shape == (4, 23, 8, 8), out.shape
    max_err = float(jnp.max(jnp.abs(out - ref)))
    assert jnp.allclose(out, ref, atol=1e-4, rtol=1e-4), max_err

    print("KERNEL_OK")
</pallas_src>

<mosaic_0001>
module attributes {stable_mosaic.version = 11 : i64} {
  func.func @kernel(%arg0: i32, %arg1: memref<8x256xf32, #tpu.memory_space<vmem>>, %arg2: memref<9x256xf32, #tpu.memory_space<vmem>>, %arg3: memref<16x72xf32, #tpu.memory_space<vmem>>, %arg4: memref<16x1xf32, #tpu.memory_space<vmem>>, %arg5: memref<8x1xf32, #tpu.memory_space<vmem>>, %arg6: memref<8x1xf32, #tpu.memory_space<vmem>>, %arg7: memref<16x216xf32, #tpu.memory_space<vmem>>, %arg8: memref<16x1xf32, #tpu.memory_space<vmem>>, %arg9: memref<24x1xf32, #tpu.memory_space<vmem>>, %arg10: memref<24x1xf32, #tpu.memory_space<vmem>>, %arg11: memref<40x256xf32, #tpu.memory_space<vmem>>) attributes {dimension_semantics = [#tpu.dimension_semantics<arbitrary>], iteration_bounds = array<i64: 1>, scalar_prefetch = 0 : i64, scratch_operands = 0 : i64, tpu.core_type = #tpu.core_type<tc>, window_params = [{pipeline_mode = #tpu.pipeline_mode<synchronous>, transform_indices = @transform_0, window_bounds = array<i64: 8, 256>}, {pipeline_mode = #tpu.pipeline_mode<synchronous>, transform_indices = @transform_1, window_bounds = array<i64: 9, 256>}, {pipeline_mode = #tpu.pipeline_mode<synchronous>, transform_indices = @transform_2, window_bounds = array<i64: 16, 72>}, {pipeline_mode = #tpu.pipeline_mode<synchronous>, transform_indices = @transform_3, window_bounds = array<i64: 16, 1>}, {pipeline_mode = #tpu.pipeline_mode<synchronous>, transform_indices = @transform_4, window_bounds = array<i64: 8, 1>}, {pipeline_mode = #tpu.pipeline_mode<synchronous>, transform_indices = @transform_5, window_bounds = array<i64: 8, 1>}, {pipeline_mode = #tpu.pipeline_mode<synchronous>, transform_indices = @transform_6, window_bounds = array<i64: 16, 216>}, {pipeline_mode = #tpu.pipeline_mode<synchronous>, transform_indices = @transform_7, window_bounds = array<i64: 16, 1>}, {pipeline_mode = #tpu.pipeline_mode<synchronous>, transform_indices = @transform_8, window_bounds = array<i64: 24, 1>}, {pipeline_mode = #tpu.pipeline_mode<synchronous>, transform_indices = @transform_9, window_bounds = array<i64: 24, 1>}, {pipeline_mode = #tpu.pipeline_mode<synchronous>, transform_indices = @transform_10, window_bounds = array<i64: 40, 256>}]} {
    %c0 = arith.constant 0 : index
    %c0_0 = arith.constant 0 : index
    %0 = vector.load %arg2[%c0, %c0_0] : memref<9x256xf32, #tpu.memory_space<vmem>>, vector<9x256xf32>
    %c0_1 = arith.constant 0 : index
    %c0_2 = arith.constant 0 : index
    %1 = vector.load %arg1[%c0_1, %c0_2] : memref<8x256xf32, #tpu.memory_space<vmem>>, vector<8x256xf32>
    %c0_3 = arith.constant 0 : index
    %c0_4 = arith.constant 0 : index
    %2 = vector.load %arg11[%c0_3, %c0_4] : memref<40x256xf32, #tpu.memory_space<vmem>>, vector<8x256xf32>
    tpu.vector_store %arg11[%c0_3, %c0_4], %1 {strides = array<i32>} : memref<40x256xf32, #tpu.memory_space<vmem>>, vector<8x256xf32>,
    %c0_5 = arith.constant 0 : index
    %c0_6 = arith.constant 0 : index
    %3 = vector.load %arg11[%c0_5, %c0_6] : memref<40x256xf32, #tpu.memory_space<vmem>>, vector<8x256xf32>
    %cst = arith.constant dense<0.000000e+00> : vector<8xf32>
    %4 = vector.multi_reduction <add>, %3, %cst [1] : vector<8x256xf32> to vector<8xf32>
    %5 = vector.shape_cast %4 : vector<8xf32> to vector<8x1xf32>
    %cst_7 = arith.constant 2.560000e+02 : f32
    %6 = vector.broadcast %cst_7 : f32 to vector<8x1xf32>
    %7 = arith.divf %5, %6 : vector<8x1xf32>
    %8 = arith.mulf %3, %3 : vector<8x256xf32>
    %cst_8 = arith.constant dense<0.000000e+00> : vector<8xf32>
    %9 = vector.multi_reduction <add>, %8, %cst_8 [1] : vector<8x256xf32> to vector<8xf32>
    %10 = vector.shape_cast %9 : vector<8xf32> to vector<8x1xf32>
    %cst_9 = arith.constant 2.560000e+02 : f32
    %11 = vector.broadcast %cst_9 : f32 to vector<8x1xf32>
    %12 = arith.divf %10, %11 : vector<8x1xf32>
    %13 = arith.mulf %7, %7 : vector<8x1xf32>
    %14 = arith.subf %12, %13 : vector<8x1xf32>
    %cst_10 = arith.constant 0.000000e+00 : f32
    %15 = vector.broadcast %cst_10 : f32 to vector<8x1xf32>
    %16 = arith.maximumf %14, %15 : vector<8x1xf32>
    %c0_11 = arith.constant 0 : index
    %c0_12 = arith.constant 0 : index
    %17 = vector.load %arg5[%c0_11, %c0_12] : memref<8x1xf32, #tpu.memory_space<vmem>>, vector<8x1xf32>
    %cst_13 = arith.constant 9.99999974E-6 : f32
    %18 = vector.broadcast %cst_13 : f32 to vector<8x1xf32>
    %19 = arith.addf %16, %18 : vector<8x1xf32>
    %20 = math.rsqrt %19 : vector<8x1xf32>
    %21 = arith.mulf %17, %20 : vector<8x1xf32>
    %c0_14 = arith.constant 0 : index
    %c0_15 = arith.constant 0 : index
    %22 = vector.load %arg6[%c0_14, %c0_15] : memref<8x1xf32, #tpu.memory_space<vmem>>, vector<8x1xf32>
    %23 = arith.mulf %7, %21 : vector<8x1xf32>
    %24 = arith.subf %22, %23 : vector<8x1xf32>
    %25 = vector.broadcast %21 : vector<8x1xf32> to vector<8x256xf32>
    %26 = arith.mulf %3, %25 : vector<8x256xf32>
    %27 = vector.broadcast %24 : vector<8x1xf32> to vector<8x256xf32>
    %28 = arith.addf %26, %27 : vector<8x256xf32>
    %cst_16 = arith.constant 0.000000e+00 : f32
    %29 = vector.broadcast %cst_16 : f32 to vector<8x256xf32>
    %30 = arith.maximumf %28, %29 : vector<8x256xf32>
    %c9_i32 = arith.constant 9 : i32
    %31 = tpu.dynamic_rotate %30 by %c9_i32 dim 1 : vector<8x256xf32>, i32 -> vector<8x256xf32>
    %32 = vector.extract_strided_slice %0 {offsets = [0, 0], sizes = [1, 256], strides = [1, 1]} : vector<9x256xf32> to vector<1x256xf32>
    %33 = vector.broadcast %32 : vector<1x256xf32> to vector<8x256xf32>
    %34 = arith.mulf %31, %33 : vector<8x256xf32>
    %c8_i32 = arith.constant 8 : i32
    %35 = tpu.dynamic_rotate %30 by %c8_i32 dim 1 : vector<8x256xf32>, i32 -> vector<8x256xf32>
    %36 = vector.extract_strided_slice %0 {offsets = [1, 0], sizes = [1, 256], strides = [1, 1]} : vector<9x256xf32> to vector<1x256xf32>
    %37 = vector.broadcast %36 : vector<1x256xf32> to vector<8x256xf32>
    %38 = arith.mulf %35, %37 : vector<8x256xf32>
    %c7_i32 = arith.constant 7 : i32
    %39 = tpu.dynamic_rotate %30 by %c7_i32 dim 1 : vector<8x256xf32>, i32 -> vector<8x256xf32>
    %40 = vector.extract_strided_slice %0 {offsets = [2, 0], sizes = [1, 256], strides = [1, 1]} : vector<9x256xf32> to vector<1x256xf32>
    %41 = vector.broadcast %40 : vector<1x256xf32> to vector<8x256xf32>
    %42 = arith.mulf %39, %41 : vector<8x256xf32>
    %c1_i32 = arith.constant 1 : i32
    %43 = tpu.dynamic_rotate %30 by %c1_i32 dim 1 : vector<8x256xf32>, i32 -> vector<8x256xf32>
    %44 = vector.extract_strided_slice %0 {offsets = [3, 0], sizes = [1, 256], strides = [1, 1]} : vector<9x256xf32> to vector<1x256xf32>
    %45 = vector.broadcast %44 : vector<1x256xf32> to vector<8x256xf32>
    %46 = arith.mulf %43, %45 : vector<8x256xf32>
    %c255_i32 = arith.constant 255 : i32
    %47 = tpu.dynamic_rotate %30 by %c255_i32 dim 1 : vector<8x256xf32>, i32 -> vector<8x256xf32>
    %48 = vector.extract_strided_slice %0 {offsets = [5, 0], sizes = [1, 256], strides = [1, 1]} : vector<9x256xf32> to vector<1x256xf32>
    %49 = vector.broadcast %48 : vector<1x256xf32> to vector<8x256xf32>
    %50 = arith.mulf %47, %49 : vector<8x256xf32>
    %c249_i32 = arith.constant 249 : i32
    %51 = tpu.dynamic_rotate %30 by %c249_i32 dim 1 : vector<8x256xf32>, i32 -> vector<8x256xf32>
    %52 = vector.extract_strided_slice %0 {offsets = [6, 0], sizes = [1, 256], strides = [1, 1]} : vector<9x256xf32> to vector<1x256xf32>
    %53 = vector.broadcast %52 : vector<1x256xf32> to vector<8x256xf32>
    %54 = arith.mulf %51, %53 : vector<8x256xf32>
    %c248_i32 = arith.constant 248 : i32
    %55 = tpu.dynamic_rotate %30 by %c248_i32 dim 1 : vector<8x256xf32>, i32 -> vector<8x256xf32>
    %56 = vector.extract_strided_slice %0 {offsets = [7, 0], sizes = [1, 256], strides = [1, 1]} : vector<9x256xf32> to vector<1x256xf32>
    %57 = vector.broadcast %56 : vector<1x256xf32> to vector<8x256xf32>
    %58 = arith.mulf %55, %57 : vector<8x256xf32>
    %c247_i32 = arith.constant 247 : i32
    %59 = tpu.dynamic_rotate %30 by %c247_i32 dim 1 : vector<8x256xf32>, i32 -> vector<8x256xf32>
    %60 = vector.extract_strided_slice %0 {offsets = [8, 0], sizes = [1, 256], strides = [1, 1]} : vector<9x256xf32> to vector<1x256xf32>
    %61 = vector.broadcast %60 : vector<1x256xf32> to vector<8x256xf32>
    %62 = arith.mulf %59, %61 : vector<8x256xf32>
    %63 = tpu.concatenate %34, %38, %42, %46, %30, %50, %54, %58, %62 in 0 : vector<8x256xf32>, vector<8x256xf32>, vector<8x256xf32>, vector<8x256xf32>, vector<8x256xf32>, vector<8x256xf32>, vector<8x256xf32>, vector<8x256xf32>, vector<8x256xf32> -> vector<72x256xf32>
    %c0_17 = arith.constant 0 : index
    %c0_18 = arith.constant 0 : index
    %64 = vector.load %arg3[%c0_17, %c0_18] : memref<16x72xf32, #tpu.memory_space<vmem>>, vector<16x72xf32>
    %cst_19 = arith.constant dense<0.000000e+00> : vector<16x256xf32>
    %65 = tpu.matmul %64, %63, %cst_19 {dimension_numbers = #tpu.dot_dimension_numbers<[1], [0], [0], [1], [0, 0, 1, 1], [], []>} : vector<16x72xf32>, vector<72x256xf32>, vector<16x256xf32> -> vector<16x256xf32>
    %c0_20 = arith.constant 0 : index
    %c0_21 = arith.constant 0 : index
    %66 = vector.load %arg4[%c0_20, %c0_21] : memref<16x1xf32, #tpu.memory_space<vmem>>, vector<16x1xf32>
    %67 = vector.broadcast %66 : vector<16x1xf32> to vector<16x256xf32>
    %68 = arith.addf %65, %67 : vector<16x256xf32>
    %c8 = arith.constant 8 : index
    %c0_22 = arith.constant 0 : index
    %69 = vector.load %arg11[%c8, %c0_22] : memref<40x256xf32, #tpu.memory_space<vmem>>, vector<16x256xf32>
    tpu.vector_store %arg11[%c8, %c0_22], %68 {strides = array<i32>} : memref<40x256xf32, #tpu.memory_space<vmem>>, vector<16x256xf32>,
    %c0_23 = arith.constant 0 : index
    %c0_24 = arith.constant 0 : index
    %70 = vector.load %arg11[%c0_23, %c0_24] : memref<40x256xf32, #tpu.memory_space<vmem>>, vector<24x256xf32>
    %cst_25 = arith.constant dense<0.000000e+00> : vector<24xf32>
    %71 = vector.multi_reduction <add>, %70, %cst_25 [1] : vector<24x256xf32> to vector<24xf32>
    %72 = vector.shape_cast %71 : vector<24xf32> to vector<24x1xf32>
    %cst_26 = arith.constant 2.560000e+02 : f32
    %73 = vector.broadcast %cst_26 : f32 to vector<24x1xf32>
    %74 = arith.divf %72, %73 : vector<24x1xf32>
    %75 = arith.mulf %70, %70 : vector<24x256xf32>
    %cst_27 = arith.constant dense<0.000000e+00> : vector<24xf32>
    %76 = vector.multi_reduction <add>, %75, %cst_27 [1] : vector<24x256xf32> to vector<24xf32>
    %77 = vector.shape_cast %76 : vector<24xf32> to vector<24x1xf32>
    %cst_28 = arith.constant 2.560000e+02 : f32
    %78 = vector.broadcast %cst_28 : f32 to vector<24x1xf32>
    %79 = arith.divf %77, %78 : vector<24x1xf32>
    %80 = arith.mulf %74, %74 : vector<24x1xf32>
    %81 = arith.subf %79, %80 : vector<24x1xf32>
    %cst_29 = arith.constant 0.000000e+00 : f32
    %82 = vector.broadcast %cst_29 : f32 to vector<24x1xf32>
    %83 = arith.maximumf %81, %82 : vector<24x1xf32>
    %c0_30 = arith.constant 0 : index
    %c0_31 = arith.constant 0 : index
    %84 = vector.load %arg9[%c0_30, %c0_31] : memref<24x1xf32, #tpu.memory_space<vmem>>, vector<24x1xf32>
    %cst_32 = arith.constant 9.99999974E-6 : f32
    %85 = vector.broadcast %cst_32 : f32 to vector<24x1xf32>
    %86 = arith.addf %83, %85 : vector<24x1xf32>
    %87 = math.rsqrt %86 : vector<24x1xf32>
    %88 = arith.mulf %84, %87 : vector<24x1xf32>
    %c0_33 = arith.constant 0 : index
    %c0_34 = arith.constant 0 : index
    %89 = vector.load %arg10[%c0_33, %c0_34] : memref<24x1xf32, #tpu.memory_space<vmem>>, vector<24x1xf32>
    %90 = arith.mulf %74, %88 : vector<24x1xf32>
    %91 = arith.subf %89, %90 : vector<24x1xf32>
    %92 = vector.broadcast %88 : vector<24x1xf32> to vector<24x256xf32>
    %93 = arith.mulf %70, %92 : vector<24x256xf32>
    %94 = vector.broadcast %91 : vector<24x1xf32> to vector<24x256xf32>
    %95 = arith.addf %93, %94 : vector<24x256xf32>
    %cst_35 = arith.constant 0.000000e+00 : f32
    %96 = vector.broadcast %cst_35 : f32 to vector<24x256xf32>
    %97 = arith.maximumf %95, %96 : vector<24x256xf32>
    %c9_i32_36 = arith.constant 9 : i32
    %98 = tpu.dynamic_rotate %97 by %c9_i32_36 dim 1 : vector<24x256xf32>, i32 -> vector<24x256xf32>
    %99 = vector.extract_strided_slice %0 {offsets = [0, 0], sizes = [1, 256], strides = [1, 1]} : vector<9x256xf32> to vector<1x256xf32>
    %100 = vector.broadcast %99 : vector<1x256xf32> to vector<24x256xf32>
    %101 = arith.mulf %98, %100 : vector<24x256xf32>
    %c8_i32_37 = arith.constant 8 : i32
    %102 = tpu.dynamic_rotate %97 by %c8_i32_37 dim 1 : vector<24x256xf32>, i32 -> vector<24x256xf32>
    %103 = vector.extract_strided_slice %0 {offsets = [1, 0], sizes = [1, 256], strides = [1, 1]} : vector<9x256xf32> to vector<1x256xf32>
    %104 = vector.broadcast %103 : vector<1x256xf32> to vector<24x256xf32>
    %105 = arith.mulf %102, %104 : vector<24x256xf32>
    %c7_i32_38 = arith.constant 7 : i32
    %106 = tpu.dynamic_rotate %97 by %c7_i32_38 dim 1 : vector<24x256xf32>, i32 -> vector<24x256xf32>
    %107 = vector.extract_strided_slice %0 {offsets = [2, 0], sizes = [1, 256], strides = [1, 1]} : vector<9x256xf32> to vector<1x256xf32>
    %108 = vector.broadcast %107 : vector<1x256xf32> to vector<24x256xf32>
    %109 = arith.mulf %106, %108 : vector<24x256xf32>
    %c1_i32_39 = arith.constant 1 : i32
    %110 = tpu.dynamic_rotate %97 by %c1_i32_39 dim 1 : vector<24x256xf32>, i32 -> vector<24x256xf32>
    %111 = vector.extract_strided_slice %0 {offsets = [3, 0], sizes = [1, 256], strides = [1, 1]} : vector<9x256xf32> to vector<1x256xf32>
    %112 = vector.broadcast %111 : vector<1x256xf32> to vector<24x256xf32>
    %113 = arith.mulf %110, %112 : vector<24x256xf32>
    %c255_i32_40 = arith.constant 255 : i32
    %114 = tpu.dynamic_rotate %97 by %c255_i32_40 dim 1 : vector<24x256xf32>, i32 -> vector<24x256xf32>
    %115 = vector.extract_strided_slice %0 {offsets = [5, 0], sizes = [1, 256], strides = [1, 1]} : vector<9x256xf32> to vector<1x256xf32>
    %116 = vector.broadcast %115 : vector<1x256xf32> to vector<24x256xf32>
    %117 = arith.mulf %114, %116 : vector<24x256xf32>
    %c249_i32_41 = arith.constant 249 : i32
    %118 = tpu.dynamic_rotate %97 by %c249_i32_41 dim 1 : vector<24x256xf32>, i32 -> vector<24x256xf32>
    %119 = vector.extract_strided_slice %0 {offsets = [6, 0], sizes = [1, 256], strides = [1, 1]} : vector<9x256xf32> to vector<1x256xf32>
    %120 = vector.broadcast %119 : vector<1x256xf32> to vector<24x256xf32>
    %121 = arith.mulf %118, %120 : vector<24x256xf32>
    %c248_i32_42 = arith.constant 248 : i32
    %122 = tpu.dynamic_rotate %97 by %c248_i32_42 dim 1 : vector<24x256xf32>, i32 -> vector<24x256xf32>
    %123 = vector.extract_strided_slice %0 {offsets = [7, 0], sizes = [1, 256], strides = [1, 1]} : vector<9x256xf32> to vector<1x256xf32>
    %124 = vector.broadcast %123 : vector<1x256xf32> to vector<24x256xf32>
    %125 = arith.mulf %122, %124 : vector<24x256xf32>
    %c247_i32_43 = arith.constant 247 : i32
    %126 = tpu.dynamic_rotate %97 by %c247_i32_43 dim 1 : vector<24x256xf32>, i32 -> vector<24x256xf32>
    %127 = vector.extract_strided_slice %0 {offsets = [8, 0], sizes = [1, 256], strides = [1, 1]} : vector<9x256xf32> to vector<1x256xf32>
    %128 = vector.broadcast %127 : vector<1x256xf32> to vector<24x256xf32>
    %129 = arith.mulf %126, %128 : vector<24x256xf32>
    %130 = tpu.concatenate %101, %105, %109, %113, %97, %117, %121, %125, %129 in 0 : vector<24x256xf32>, vector<24x256xf32>, vector<24x256xf32>, vector<24x256xf32>, vector<24x256xf32>, vector<24x256xf32>, vector<24x256xf32>, vector<24x256xf32>, vector<24x256xf32> -> vector<216x256xf32>
    %c0_44 = arith.constant 0 : index
    %c0_45 = arith.constant 0 : index
    %131 = vector.load %arg7[%c0_44, %c0_45] : memref<16x216xf32, #tpu.memory_space<vmem>>, vector<16x216xf32>
    %cst_46 = arith.constant dense<0.000000e+00> : vector<16x256xf32>
    %132 = tpu.matmul %131, %130, %cst_46 {dimension_numbers = #tpu.dot_dimension_numbers<[1], [0], [0], [1], [0, 0, 1, 1], [], []>} : vector<16x216xf32>, vector<216x256xf32>, vector<16x256xf32> -> vector<16x256xf32>
    %c0_47 = arith.constant 0 : index
    %c0_48 = arith.constant 0 : index
    %133 = vector.load %arg8[%c0_47, %c0_48] : memref<16x1xf32, #tpu.memory_space<vmem>>, vector<16x1xf32>
    %134 = vector.broadcast %133 : vector<16x1xf32> to vector<16x256xf32>
    %135 = arith.addf %132, %134 : vector<16x256xf32>
    %c24 = arith.constant 24 : index
    %c0_49 = arith.constant 0 : index
    %136 = vector.load %arg11[%c24, %c0_49] : memref<40x256xf32, #tpu.memory_space<vmem>>, vector<16x256xf32>
    tpu.vector_store %arg11[%c24, %c0_49], %135 {strides = array<i32>} : memref<40x256xf32, #tpu.memory_space<vmem>>, vector<16x256xf32>,
    return
  }
  func.func @transform_0(%arg0: i32) -> (i32, i32) {
    %c0_i32 = arith.constant 0 : i32
    %c0_i32_0 = arith.constant 0 : i32
    %c0_i32_1 = arith.constant 0 : i32
    return %c0_i32, %c0_i32_0 : i32, i32
  }
  func.func @transform_1(%arg0: i32) -> (i32, i32) {
    %c0_i32 = arith.constant 0 : i32
    %c0_i32_0 = arith.constant 0 : i32
    %c0_i32_1 = arith.constant 0 : i32
    return %c0_i32, %c0_i32_0 : i32, i32
  }
  func.func @transform_2(%arg0: i32) -> (i32, i32) {
    %c0_i32 = arith.constant 0 : i32
    %c0_i32_0 = arith.constant 0 : i32
    %c0_i32_1 = arith.constant 0 : i32
    return %c0_i32, %c0_i32_0 : i32, i32
  }
  func.func @transform_3(%arg0: i32) -> (i32, i32) {
    %c0_i32 = arith.constant 0 : i32
    %c0_i32_0 = arith.constant 0 : i32
    %c0_i32_1 = arith.constant 0 : i32
    return %c0_i32, %c0_i32_0 : i32, i32
  }
  func.func @transform_4(%arg0: i32) -> (i32, i32) {
    %c0_i32 = arith.constant 0 : i32
    %c0_i32_0 = arith.constant 0 : i32
    %c0_i32_1 = arith.constant 0 : i32
    return %c0_i32, %c0_i32_0 : i32, i32
  }
  func.func @transform_5(%arg0: i32) -> (i32, i32) {
    %c0_i32 = arith.constant 0 : i32
    %c0_i32_0 = arith.constant 0 : i32
    %c0_i32_1 = arith.constant 0 : i32
    return %c0_i32, %c0_i32_0 : i32, i32
  }
  func.func @transform_6(%arg0: i32) -> (i32, i32) {
    %c0_i32 = arith.constant 0 : i32
    %c0_i32_0 = arith.constant 0 : i32
    %c0_i32_1 = arith.constant 0 : i32
    return %c0_i32, %c0_i32_0 : i32, i32
  }
  func.func @transform_7(%arg0: i32) -> (i32, i32) {
    %c0_i32 = arith.constant 0 : i32
    %c0_i32_0 = arith.constant 0 : i32
    %c0_i32_1 = arith.constant 0 : i32
    return %c0_i32, %c0_i32_0 : i32, i32
  }
  func.func @transform_8(%arg0: i32) -> (i32, i32) {
    %c0_i32 = arith.constant 0 : i32
    %c0_i32_0 = arith.constant 0 : i32
    %c0_i32_1 = arith.constant 0 : i32
    return %c0_i32, %c0_i32_0 : i32, i32
  }
  func.func @transform_9(%arg0: i32) -> (i32, i32) {
    %c0_i32 = arith.constant 0 : i32
    %c0_i32_0 = arith.constant 0 : i32
    %c0_i32_1 = arith.constant 0 : i32
    return %c0_i32, %c0_i32_0 : i32, i32
  }
  func.func @transform_10(%arg0: i32) -> (i32, i32) {
    %c0_i32 = arith.constant 0 : i32
    %c0_i32_0 = arith.constant 0 : i32
    %c0_i32_1 = arith.constant 0 : i32
    return %c0_i32, %c0_i32_0 : i32, i32
  }
}

</mosaic_0001>

<llo_original>
// kernel: forward.1
$region0: #{forward.1}
  #allocation0 [shape = 'u32[]', space=smem, size = 0x4, offset = 0x4, fixed_abs, tag = 'smem constant byte address 0x4 - core index']
  #allocation1 [shape = 'u32[72,128]{1,0:T(1,128)}', space=vmem, size = 0x9000, scoped, tag = 'internal scratch']
  %s0 = inlined_call_operand.vmem [shape: f32[8,256], index: 0, kind: input, shape index: {}]
  %s1 = inlined_call_operand.vmem [shape: f32[9,256], index: 1, kind: input, shape index: {}]
  %s2 = inlined_call_operand.vmem [shape: f32[16,72], index: 2, kind: input, shape index: {}]
  %s3 = inlined_call_operand.vmem [shape: f32[16,1], index: 3, kind: input, shape index: {}]
  %s4 = inlined_call_operand.vmem [shape: f32[8,1], index: 4, kind: input, shape index: {}]
  %s5 = inlined_call_operand.vmem [shape: f32[8,1], index: 5, kind: input, shape index: {}]
  %s6 = inlined_call_operand.vmem [shape: f32[16,216], index: 6, kind: input, shape index: {}]
  %s7 = inlined_call_operand.vmem [shape: f32[16,1], index: 7, kind: input, shape index: {}]
  %s8 = inlined_call_operand.vmem [shape: f32[24,1], index: 8, kind: input, shape index: {}]
  %s9 = inlined_call_operand.vmem [shape: f32[24,1], index: 9, kind: input, shape index: {}]
  %s10 = inlined_call_operand.vmem [shape: f32[40,256], index: 10, kind: output, shape index: {}]
  %s11 = sld [smem:[#allocation0]]
  $region50: #{forward.1} parent=0
    _
  %s13 = ssub.s32 1, %s11
  %s14 = scalar_select 0, %s13, %s11
  // Predicated region
  $region2: #{forward.1} parent=0 // pred_check
    _
  $region3: #{forward.1} parent=0 // pred_check_branch
    %16 = sbr.rel (0) target = $region5
  $region4: #{forward.1} parent=0 // pred_region
    _
  $region5: #{forward.1} parent=0 // pred_fallthru
    _
  // Predicated region
  $region6: #{forward.1} parent=0 // pred_check
    _
  $region7: #{forward.1} parent=0 // pred_check_branch
    %18 = sbr.rel (0) target = $region9
  $region8: #{forward.1} parent=0 // pred_region
    _
  $region9: #{forward.1} parent=0 // pred_fallthru
    _
  // Predicated region
  $region10: #{forward.1} parent=0 // pred_check
    _
  $region11: #{forward.1} parent=0 // pred_check_branch
    %20 = sbr.rel (0) target = $region13
  $region12: #{forward.1} parent=0 // pred_region
    _
  $region13: #{forward.1} parent=0 // pred_fallthru
    _
  // Predicated region
  $region14: #{forward.1} parent=0 // pred_check
    _
  $region15: #{forward.1} parent=0 // pred_check_branch
    %22 = sbr.rel (0) target = $region17
  $region16: #{forward.1} parent=0 // pred_region
    _
  $region17: #{forward.1} parent=0 // pred_fallthru
    _
  // Predicated region
  $region18: #{forward.1} parent=0 // pred_check
    _
  $region19: #{forward.1} parent=0 // pred_check_branch
    %24 = sbr.rel (0) target = $region21
  $region20: #{forward.1} parent=0 // pred_region
    _
  $region21: #{forward.1} parent=0 // pred_fallthru
    _
  // Predicated region
  $region22: #{forward.1} parent=0 // pred_check
    _
  $region23: #{forward.1} parent=0 // pred_check_branch
    %26 = sbr.rel (0) target = $region25
  $region24: #{forward.1} parent=0 // pred_region
    _
  $region25: #{forward.1} parent=0 // pred_fallthru
    _
  // Predicated region
  $region26: #{forward.1} parent=0 // pred_check
    _
  $region27: #{forward.1} parent=0 // pred_check_branch
    %28 = sbr.rel (0) target = $region29
  $region28: #{forward.1} parent=0 // pred_region
    _
  $region29: #{forward.1} parent=0 // pred_fallthru
    _
  // Predicated region
  $region30: #{forward.1} parent=0 // pred_check
    _
  $region31: #{forward.1} parent=0 // pred_check_branch
    %30 = sbr.rel (0) target = $region33
  $region32: #{forward.1} parent=0 // pred_region
    _
  $region33: #{forward.1} parent=0 // pred_fallthru
    _
  // Predicated region
  $region34: #{forward.1} parent=0 // pred_check
    _
  $region35: #{forward.1} parent=0 // pred_check_branch
    %32 = sbr.rel (0) target = $region37
  $region36: #{forward.1} parent=0 // pred_region
    _
  $region37: #{forward.1} parent=0 // pred_fallthru
    _
  // Predicated region
  $region38: #{forward.1} parent=0 // pred_check
    _
  $region39: #{forward.1} parent=0 // pred_check_branch
    %34 = sbr.rel (0) target = $region41
  $region40: #{forward.1} parent=0 // pred_region
    _
  $region41: #{forward.1} parent=0 // pred_fallthru
    _
  %v35 = vld [vmem:[%s1] sm:$0xff]
  %v36 = vld [vmem:[%s1 + $0x8] sm:$0xff]
  %v37 = vld [vmem:[%s1 + $0x10] sm:$0x1]
  %v38 = vld [vmem:[%s1 + $0x18] sm:$0x1]
  %v39 = vld [vmem:[%s0] sm:$0xff]
  %v40 = vld [vmem:[%s0 + $0x8] sm:$0xff]
  %41 = vst [vmem:[%s10] sm:$0xff] %v39
  %42 = vst [vmem:[%s10 + $0x8] sm:$0xff] %v40
  %v43 = vld [vmem:[%s10] sm:$0xff]
  %v44 = vld [vmem:[%s10 + $0x8] sm:$0xff]
  %v45 = vadd.f32 %v43, %v44
  %46 = vadd.xlane.f32.xlu0 %v45
  %v47 = vpop.xlane.xlu0 %46
  %v48 = vrcp.pop 256.0
  %v49 = vmul.f32 256.0, %v48
  %v50 = vsub.f32 1.0, %v49
  %v51 = vmul.f32 %v48, %v50
  %v52 = vadd.f32 %v48, %v51
  %vm53 = vweird.f32 %v48
  %v54 = vsel %vm53, %v48, %v52
  %v55 = vmul.f32 %v47, %v54
  %v56 = vmul.f32 %v43, %v43
  %v57 = vmul.f32 %v44, %v44
  %v58 = vadd.f32 %v56, %v57
  %59 = vadd.xlane.f32.xlu0 %v58
  %v60 = vpop.xlane.xlu0 %59
  %v61 = vmul.f32 %v60, %v54
  %v62 = vmul.f32 %v55, %v55
  %v63 = vsub.f32 %v61, %v62
  %v64 = vmax.f32 %v63, 0.0
  %v65 = vld [vmem:[%s4] sm:$0xff]
  %v66 = vadd.f32 %v64, 1e-05
  %v67 = vrsqrt.pop %v66
  %v68 = vmul.f32 %v67, %v66
  %v69 = vmul.f32 %v68, %v67
  %v70 = vmul.f32 0.5, %v69
  %v71 = vsub.f32 1.5, %v70
  %v72 = vmul.f32 %v67, %v71
  %vm73 = vweird.f32 %v66
  %vm74 = vweird.f32 %v67
  %vm75 = vmor %vm73, %vm74
  %v76 = vsel %vm75, %v67, %v72
  %v77 = vmul.f32 %v65, %v76
  %v78 = vld [vmem:[%s5] sm:$0xff]
  %v79 = vmul.f32 %v55, %v77
  %v80 = vsub.f32 %v78, %v79
  %82 = vset.pattern.permute.xlu0 0
  %83 = vperm.xlu0 %82, %v77
  %v84 = vpop.permute.xlu0 %83
  %v86 = vmul.f32 %v43, %v84
  %v87 = vmul.f32 %v44, %v84
  %89 = vset.pattern.permute.xlu0 0
  %90 = vperm.xlu0 %89, %v80
  %v91 = vpop.permute.xlu0 %90
  %v93 = vadd.f32 %v86, %v91
  %v94 = vadd.f32 %v87, %v91
  %v95 = vmax.f32 %v93, 0.0
  %v96 = vmax.f32 %v94, 0.0
  %97 = vrot.lane.b32.xlu0 %v95, 9
  %v98 = vpop.permute.xlu0 %97
  %99 = vrot.lane.b32.xlu0 %v96, 9
  %v100 = vpop.permute.xlu0 %99
  %v101 = vlaneseq
  %v102 = vand.u32 %v101, 127
  %vm103 = vcmp.lt.s32.totalorder %v102, 9
  %v104 = vsel %vm103, %v98, %v100
  %v105 = vsel %vm103, %v100, %v98
  %v106 = vperm.slane %v35, 0
  %v107 = vperm.slane %v36, 0
  %v108 = vmul.f32 %v105, %v106
  %v109 = vmul.f32 %v104, %v107
  %110 = vrot.lane.b32.xlu0 %v95, 8
  %v111 = vpop.permute.xlu0 %110
  %112 = vrot.lane.b32.xlu0 %v96, 8
  %v113 = vpop.permute.xlu0 %112
  %vm114 = vcmp.lt.s32.totalorder %v102, 8
  %v115 = vsel %vm114, %v111, %v113
  %v116 = vsel %vm114, %v113, %v111
  %v117 = vperm.slane %v35, 1
  %v118 = vperm.slane %v36, 1
  %v119 = vmul.f32 %v116, %v117
  %v120 = vmul.f32 %v115, %v118
  %121 = vrot.lane.b32.xlu0 %v95, 7
  %v122 = vpop.permute.xlu0 %121
  %123 = vrot.lane.b32.xlu0 %v96, 7
  %v124 = vpop.permute.xlu0 %123
  %vm125 = vcmp.lt.s32.totalorder %v102, 7
  %v126 = vsel %vm125, %v122, %v124
  %v127 = vsel %vm125, %v124, %v122
  %v128 = vperm.slane %v35, 2
  %v129 = vperm.slane %v36, 2
  %v130 = vmul.f32 %v127, %v128
  %v131 = vmul.f32 %v126, %v129
  %132 = vrot.lane.b32.xlu0 %v95, 1
  %v133 = vpop.permute.xlu0 %132
  %134 = vrot.lane.b32.xlu0 %v96, 1
  %v135 = vpop.permute.xlu0 %134
  %vm136 = vcmp.lt.s32.totalorder %v102, 1
  %v137 = vsel %vm136, %v133, %v135
  %v138 = vsel %vm136, %v135, %v133
  %v139 = vperm.slane %v35, 3
  %v140 = vperm.slane %v36, 3
  %v141 = vmul.f32 %v138, %v139
  %v142 = vmul.f32 %v137, %v140
  %143 = vrot.lane.b32.xlu0 %v95, 127
  %v144 = vpop.permute.xlu0 %143
  %145 = vrot.lane.b32.xlu0 %v96, 127
  %v146 = vpop.permute.xlu0 %145
  %vm147 = vcmp.lt.s32.totalorder %v102, 127
  %v148 = vsel %vm147, %v144, %v146
  %v149 = vsel %vm147, %v146, %v144
  %v150 = vperm.slane %v35, 5
  %v151 = vperm.slane %v36, 5
  %v152 = vmul.f32 %v148, %v150
  %v153 = vmul.f32 %v149, %v151
  %154 = vrot.lane.b32.xlu0 %v95, 121
  %v155 = vpop.permute.xlu0 %154
  %156 = vrot.lane.b32.xlu0 %v96, 121
  %v157 = vpop.permute.xlu0 %156
  %vm158 = vcmp.lt.s32.totalorder %v102, 121
  %v159 = vsel %vm158, %v155, %v157
  %v160 = vsel %vm158, %v157, %v155
  %v161 = vperm.slane %v35, 6
  %v162 = vperm.slane %v36, 6
  %v163 = vmul.f32 %v159, %v161
  %v164 = vmul.f32 %v160, %v162
  %165 = vrot.lane.b32.xlu0 %v95, 120
  %v166 = vpop.permute.xlu0 %165
  %167 = vrot.lane.b32.xlu0 %v96, 120
  %v168 = vpop.permute.xlu0 %167
  %vm169 = vcmp.lt.s32.totalorder %v102, 120
  %v170 = vsel %vm169, %v166, %v168
  %v171 = vsel %vm169, %v168, %v166
  %v172 = vperm.slane %v35, 7
  %v173 = vperm.slane %v36, 7
  %v174 = vmul.f32 %v170, %v172
  %v175 = vmul.f32 %v171, %v173
  %176 = vrot.lane.b32.xlu0 %v95, 119
  %v177 = vpop.permute.xlu0 %176
  %178 = vrot.lane.b32.xlu0 %v96, 119
  %v179 = vpop.permute.xlu0 %178
  %vm180 = vcmp.lt.s32.totalorder %v102, 119
  %v181 = vsel %vm180, %v177, %v179
  %v182 = vsel %vm180, %v179, %v177
  %v183 = vperm.slane %v37, 0
  %v184 = vperm.slane %v38, 0
  %v185 = vmul.f32 %v181, %v183
  %v186 = vmul.f32 %v182, %v184
  %v187 = vld [vmem:[%s2] sm:$0xff]
  %v188 = vld [vmem:[%s2 + $0x8] sm:$0xff]
  %v189 = vld [vmem:[%s3] sm:$0xff]
  %v190 = vld [vmem:[%s3 + $0x8] sm:$0xff]
  %192 = vset.pattern.permute.xlu0 0
  %193 = vperm.xlu0 %192, %v189
  %v194 = vpop.permute.xlu0 %193
  %197 = vset.pattern.permute.xlu0 0
  %198 = vperm.xlu0 %197, %v190
  %v199 = vpop.permute.xlu0 %198
  %vm201 = vcmask 588800
  %v203 = vsel %vm201, %v187, 0
  %v206 = vsel %vm201, %v188, 0
  %208 = vmatpush.msra.mxu0 0.0
  %209 = vmatpush.msra.mxu0 0.0
  %210 = vmatpush.msra.mxu0 0.0
  %211 = vmatpush.msra.mxu0 0.0
  %212 = vmatpush.msra.mxu0 0.0
  %213 = vmatpush.msra.mxu0 0.0
  %214 = vmatpush.msra.mxu0 0.0
  %215 = vmatpush.msra.mxu0 %v185
  %216 = vmatpush.msra.mxu0 %v174
  %217 = vmatpush.msra.mxu0 %v163
  %218 = vmatpush.msra.mxu0 %v152
  %219 = vmatpush.msra.mxu0 %v95
  %220 = vmatpush.msra.mxu0 %v141
  %221 = vmatpush.msra.mxu0 %v130
  %222 = vmatpush.msra.mxu0 %v119
  %223 = vmatpush.msra.mxu0 %v108
  %224 = vmatmul.f32.gmra.mxu0 %v203
  %v225 = vpop.f32.mrf.mxu0
  %v226 = vadd.f32 %v194, %v225
  %227 = vmatmul.f32.gmra.mxu0 %v206
  %v228 = vpop.f32.mrf.mxu0
  %v229 = vadd.f32 %v199, %v228
  %230 = vdwg.mxu0
  %231 = vmatpush.msra.mxu0 0.0
  %232 = vmatpush.msra.mxu0 0.0
  %233 = vmatpush.msra.mxu0 0.0
  %234 = vmatpush.msra.mxu0 0.0
  %235 = vmatpush.msra.mxu0 0.0
  %236 = vmatpush.msra.mxu0 0.0
  %237 = vmatpush.msra.mxu0 0.0
  %238 = vmatpush.msra.mxu0 %v186
  %239 = vmatpush.msra.mxu0 %v175
  %240 = vmatpush.msra.mxu0 %v164
  %241 = vmatpush.msra.mxu0 %v153
  %242 = vmatpush.msra.mxu0 %v96
  %243 = vmatpush.msra.mxu0 %v142
  %244 = vmatpush.msra.mxu0 %v131
  %245 = vmatpush.msra.mxu0 %v120
  %246 = vmatpush.msra.mxu0 %v109
  %247 = vmatmul.f32.gmra.mxu0 %v203
  %v248 = vpop.f32.mrf.mxu0
  %v249 = vadd.f32 %v194, %v248
  %250 = vmatmul.f32.gmra.mxu0 %v206
  %v251 = vpop.f32.mrf.mxu0
  %v252 = vadd.f32 %v199, %v251
  %253 = vdwg.mxu0
  %254 = vst [vmem:[%s10 + $0x10] sm:$0xff] %v226
  %255 = vst [vmem:[%s10 + $0x18] sm:$0xff] %v249
  %256 = vst [vmem:[%s10 + $0x20] sm:$0xff] %v229
  %257 = vst [vmem:[%s10 + $0x28] sm:$0xff] %v252
  %v258 = vld [vmem:[%s10] sm:$0xff]
  %v259 = vld [vmem:[%s10 + $0x8] sm:$0xff]
  %v260 = vld [vmem:[%s10 + $0x10] sm:$0xff]
  %v261 = vld [vmem:[%s10 + $0x18] sm:$0xff]
  %v262 = vld [vmem:[%s10 + $0x20] sm:$0xff]
  %v263 = vld [vmem:[%s10 + $0x28] sm:$0xff]
  %v264 = vadd.f32 %v258, %v259
  %265 = vadd.xlane.f32.xlu0 %v264
  %v266 = vpop.xlane.xlu0 %265
  %v267 = vadd.f32 %v260, %v261
  %268 = vadd.xlane.f32.xlu0 %v267
  %v269 = vpop.xlane.xlu0 %268
  %v270 = vadd.f32 %v262, %v263
  %271 = vadd.xlane.f32.xlu0 %v270
  %v272 = vpop.xlane.xlu0 %271
  %v273 = vmul.f32 %v266, %v54
  %v274 = vmul.f32 %v269, %v54
  %v275 = vmul.f32 %v272, %v54
  %v276 = vmul.f32 %v258, %v258
  %v277 = vmul.f32 %v259, %v259
  %v278 = vmul.f32 %v260, %v260
  %v279 = vmul.f32 %v261, %v261
  %v280 = vmul.f32 %v262, %v262
  %v281 = vmul.f32 %v263, %v263
  %v282 = vadd.f32 %v276, %v277
  %283 = vadd.xlane.f32.xlu0 %v282
  %v284 = vpop.xlane.xlu0 %283
  %v285 = vadd.f32 %v278, %v279
  %286 = vadd.xlane.f32.xlu0 %v285
  %v287 = vpop.xlane.xlu0 %286
  %v288 = vadd.f32 %v280, %v281
  %289 = vadd.xlane.f32.xlu0 %v288
  %v290 = vpop.xlane.xlu0 %289
  %v291 = vmul.f32 %v284, %v54
  %v292 = vmul.f32 %v287, %v54
  %v293 = vmul.f32 %v290, %v54
  %v294 = vmul.f32 %v273, %v273
  %v295 = vmul.f32 %v274, %v274
  %v296 = vmul.f32 %v275, %v275
  %v297 = vsub.f32 %v291, %v294
  %v298 = vsub.f32 %v292, %v295
  %v299 = vsub.f32 %v293, %v296
  %v300 = vmax.f32 %v297, 0.0
  %v301 = vmax.f32 %v298, 0.0
  %v302 = vmax.f32 %v299, 0.0
  %v303 = vld [vmem:[%s8] sm:$0xff]
  %v304 = vld [vmem:[%s8 + $0x8] sm:$0xff]
  %v305 = vld [vmem:[%s8 + $0x10] sm:$0xff]
  %v306 = vadd.f32 %v300, 1e-05
  %v307 = vadd.f32 %v301, 1e-05
  %v308 = vadd.f32 %v302, 1e-05
  %v309 = vrsqrt.pop %v306
  %v310 = vmul.f32 %v309, %v306
  %v311 = vmul.f32 %v310, %v309
  %v312 = vmul.f32 0.5, %v311
  %v313 = vsub.f32 1.5, %v312
  %v314 = vmul.f32 %v309, %v313
  %vm315 = vweird.f32 %v306
  %vm316 = vweird.f32 %v309
  %vm317 = vmor %vm315, %vm316
  %v318 = vsel %vm317, %v309, %v314
  %v319 = vrsqrt.pop %v307
  %v320 = vmul.f32 %v319, %v307
  %v321 = vmul.f32 %v320, %v319
  %v322 = vmul.f32 0.5, %v321
  %v323 = vsub.f32 1.5, %v322
  %v324 = vmul.f32 %v319, %v323
  %vm325 = vweird.f32 %v307
  %vm326 = vweird.f32 %v319
  %vm327 = vmor %vm325, %vm326
  %v328 = vsel %vm327, %v319, %v324
  %v329 = vrsqrt.pop %v308
  %v330 = vmul.f32 %v329, %v308
  %v331 = vmul.f32 %v330, %v329
  %v332 = vmul.f32 0.5, %v331
  %v333 = vsub.f32 1.5, %v332
  %v334 = vmul.f32 %v329, %v333
  %vm335 = vweird.f32 %v308
  %vm336 = vweird.f32 %v329
  %vm337 = vmor %vm335, %vm336
  %v338 = vsel %vm337, %v329, %v334
  %v339 = vmul.f32 %v303, %v318
  %v340 = vmul.f32 %v304, %v328
  %v341 = vmul.f32 %v305, %v338
  %v342 = vld [vmem:[%s9] sm:$0xff]
  %v343 = vld [vmem:[%s9 + $0x8] sm:$0xff]
  %v344 = vld [vmem:[%s9 + $0x10] sm:$0xff]
  %v345 = vmul.f32 %v273, %v339
  %v346 = vmul.f32 %v274, %v340
  %v347 = vmul.f32 %v275, %v341
  %v348 = vsub.f32 %v342, %v345
  %v349 = vsub.f32 %v343, %v346
  %v350 = vsub.f32 %v344, %v347
  %352 = vset.pattern.permute.xlu0 0
  %353 = vperm.xlu0 %352, %v339
  %v354 = vpop.permute.xlu0 %353
  %357 = vset.pattern.permute.xlu0 0
  %358 = vperm.xlu0 %357, %v340
  %v359 = vpop.permute.xlu0 %358
  %362 = vset.pattern.permute.xlu0 0
  %363 = vperm.xlu0 %362, %v341
  %v364 = vpop.permute.xlu0 %363
  %v366 = vmul.f32 %v258, %v354
  %v367 = vmul.f32 %v259, %v354
  %v368 = vmul.f32 %v260, %v359
  %v369 = vmul.f32 %v261, %v359
  %v370 = vmul.f32 %v262, %v364
  %v371 = vmul.f32 %v263, %v364
  %373 = vset.pattern.permute.xlu0 0
  %374 = vperm.xlu0 %373, %v348
  %v375 = vpop.permute.xlu0 %374
  %378 = vset.pattern.permute.xlu0 0
  %379 = vperm.xlu0 %378, %v349
  %v380 = vpop.permute.xlu0 %379
  %383 = vset.pattern.permute.xlu0 0
  %384 = vperm.xlu0 %383, %v350
  %v385 = vpop.permute.xlu0 %384
  %v387 = vadd.f32 %v366, %v375
  %v388 = vadd.f32 %v367, %v375
  %v389 = vadd.f32 %v368, %v380
  %v390 = vadd.f32 %v369, %v380
  %v391 = vadd.f32 %v370, %v385
  %v392 = vadd.f32 %v371, %v385
  %v393 = vmax.f32 %v387, 0.0
  %v394 = vmax.f32 %v388, 0.0
  %v395 = vmax.f32 %v389, 0.0
  %v396 = vmax.f32 %v390, 0.0
  %v397 = vmax.f32 %v391, 0.0
  %v398 = vmax.f32 %v392, 0.0
  %399 = vrot.lane.b32.xlu0 %v393, 9
  %v400 = vpop.permute.xlu0 %399
  %401 = vrot.lane.b32.xlu0 %v395, 9
  %v402 = vpop.permute.xlu0 %401
  %403 = vrot.lane.b32.xlu0 %v397, 9
  %v404 = vpop.permute.xlu0 %403
  %405 = vrot.lane.b32.xlu0 %v394, 9
  %v406 = vpop.permute.xlu0 %405
  %407 = vrot.lane.b32.xlu0 %v396, 9
  %v408 = vpop.permute.xlu0 %407
  %409 = vrot.lane.b32.xlu0 %v398, 9
  %v410 = vpop.permute.xlu0 %409
  %v411 = vsel %vm103, %v400, %v406
  %v412 = vsel %vm103, %v402, %v408
  %v413 = vsel %vm103, %v404, %v410
  %v414 = vsel %vm103, %v406, %v400
  %v415 = vsel %vm103, %v408, %v402
  %v416 = vsel %vm103, %v410, %v404
  %v417 = vmul.f32 %v414, %v106
  %v418 = vmul.f32 %v411, %v107
  %v419 = vmul.f32 %v415, %v106
  %v420 = vmul.f32 %v412, %v107
  %v421 = vmul.f32 %v416, %v106
  %v422 = vmul.f32 %v413, %v107
  %423 = vrot.lane.b32.xlu0 %v393, 8
  %v424 = vpop.permute.xlu0 %423
  %425 = vrot.lane.b32.xlu0 %v395, 8
  %v426 = vpop.permute.xlu0 %425
  %427 = vrot.lane.b32.xlu0 %v397, 8
  %v428 = vpop.permute.xlu0 %427
  %429 = vrot.lane.b32.xlu0 %v394, 8
  %v430 = vpop.permute.xlu0 %429
  %431 = vrot.lane.b32.xlu0 %v396, 8
  %v432 = vpop.permute.xlu0 %431
  %433 = vrot.lane.b32.xlu0 %v398, 8
  %v434 = vpop.permute.xlu0 %433
  %v435 = vsel %vm114, %v424, %v430
  %v436 = vsel %vm114, %v426, %v432
  %v437 = vsel %vm114, %v428, %v434
  %v438 = vsel %vm114, %v430, %v424
  %v439 = vsel %vm114, %v432, %v426
  %v440 = vsel %vm114, %v434, %v428
  %v441 = vmul.f32 %v438, %v117
  %v442 = vmul.f32 %v435, %v118
  %v443 = vmul.f32 %v439, %v117
  %v444 = vmul.f32 %v436, %v118
  %v445 = vmul.f32 %v440, %v117
  %v446 = vmul.f32 %v437, %v118
  %447 = vrot.lane.b32.xlu0 %v393, 7
  %v448 = vpop.permute.xlu0 %447
  %449 = vrot.lane.b32.xlu0 %v395, 7
  %v450 = vpop.permute.xlu0 %449
  %451 = vrot.lane.b32.xlu0 %v397, 7
  %v452 = vpop.permute.xlu0 %451
  %453 = vrot.lane.b32.xlu0 %v394, 7
  %v454 = vpop.permute.xlu0 %453
  %455 = vrot.lane.b32.xlu0 %v396, 7
  %v456 = vpop.permute.xlu0 %455
  %457 = vrot.lane.b32.xlu0 %v398, 7
  %v458 = vpop.permute.xlu0 %457
  %v459 = vsel %vm125, %v448, %v454
  %v460 = vsel %vm125, %v450, %v456
  %v461 = vsel %vm125, %v452, %v458
  %v462 = vsel %vm125, %v454, %v448
  %v463 = vsel %vm125, %v456, %v450
  %v464 = vsel %vm125, %v458, %v452
  %v465 = vmul.f32 %v462, %v128
  %v466 = vmul.f32 %v459, %v129
  %v467 = vmul.f32 %v463, %v128
  %v468 = vmul.f32 %v460, %v129
  %v469 = vmul.f32 %v464, %v128
  %v470 = vmul.f32 %v461, %v129
  %471 = vrot.lane.b32.xlu0 %v393, 1
  %v472 = vpop.permute.xlu0 %471
  %473 = vrot.lane.b32.xlu0 %v395, 1
  %v474 = vpop.permute.xlu0 %473
  %475 = vrot.lane.b32.xlu0 %v397, 1
  %v476 = vpop.permute.xlu0 %475
  %477 = vrot.lane.b32.xlu0 %v394, 1
  %v478 = vpop.permute.xlu0 %477
  %479 = vrot.lane.b32.xlu0 %v396, 1
  %v480 = vpop.permute.xlu0 %479
  %481 = vrot.lane.b32.xlu0 %v398, 1
  %v482 = vpop.permute.xlu0 %481
  %v483 = vsel %vm136, %v472, %v478
  %v484 = vsel %vm136, %v474, %v480
  %v485 = vsel %vm136, %v476, %v482
  %v486 = vsel %vm136, %v478, %v472
  %v487 = vsel %vm136, %v480, %v474
  %v488 = vsel %vm136, %v482, %v476
  %v489 = vmul.f32 %v486, %v139
  %v490 = vmul.f32 %v483, %v140
  %v491 = vmul.f32 %v487, %v139
  %v492 = vmul.f32 %v484, %v140
  %v493 = vmul.f32 %v488, %v139
  %v494 = vmul.f32 %v485, %v140
  %495 = vrot.lane.b32.xlu0 %v393, 127
  %v496 = vpop.permute.xlu0 %495
  %497 = vrot.lane.b32.xlu0 %v395, 127
  %v498 = vpop.permute.xlu0 %497
  %499 = vrot.lane.b32.xlu0 %v397, 127
  %v500 = vpop.permute.xlu0 %499
  %501 = vrot.lane.b32.xlu0 %v394, 127
  %v502 = vpop.permute.xlu0 %501
  %503 = vrot.lane.b32.xlu0 %v396, 127
  %v504 = vpop.permute.xlu0 %503
  %505 = vrot.lane.b32.xlu0 %v398, 127
  %v506 = vpop.permute.xlu0 %505
  %v507 = vsel %vm147, %v496, %v502
  %v508 = vsel %vm147, %v498, %v504
  %v509 = vsel %vm147, %v500, %v506
  %v510 = vsel %vm147, %v502, %v496
  %v511 = vsel %vm147, %v504, %v498
  %v512 = vsel %vm147, %v506, %v500
  %v513 = vmul.f32 %v507, %v150
  %v514 = vmul.f32 %v510, %v151
  %v515 = vmul.f32 %v508, %v150
  %v516 = vmul.f32 %v511, %v151
  %v517 = vmul.f32 %v509, %v150
  %v518 = vmul.f32 %v512, %v151
  %519 = vrot.lane.b32.xlu0 %v393, 121
  %v520 = vpop.permute.xlu0 %519
  %521 = vrot.lane.b32.xlu0 %v395, 121
  %v522 = vpop.permute.xlu0 %521
  %523 = vrot.lane.b32.xlu0 %v397, 121
  %v524 = vpop.permute.xlu0 %523
  %525 = vrot.lane.b32.xlu0 %v394, 121
  %v526 = vpop.permute.xlu0 %525
  %527 = vrot.lane.b32.xlu0 %v396, 121
  %v528 = vpop.permute.xlu0 %527
  %529 = vrot.lane.b32.xlu0 %v398, 121
  %v530 = vpop.permute.xlu0 %529
  %v531 = vsel %vm158, %v520, %v526
  %v532 = vsel %vm158, %v522, %v528
  %v533 = vsel %vm158, %v524, %v530
  %v534 = vsel %vm158, %v526, %v520
  %v535 = vsel %vm158, %v528, %v522
  %v536 = vsel %vm158, %v530, %v524
  %v537 = vmul.f32 %v531, %v161
  %v538 = vmul.f32 %v534, %v162
  %v539 = vmul.f32 %v532, %v161
  %v540 = vmul.f32 %v535, %v162
  %v541 = vmul.f32 %v533, %v161
  %v542 = vmul.f32 %v536, %v162
  %543 = vrot.lane.b32.xlu0 %v393, 120
  %v544 = vpop.permute.xlu0 %543
  %545 = vrot.lane.b32.xlu0 %v395, 120
  %v546 = vpop.permute.xlu0 %545
  %547 = vrot.lane.b32.xlu0 %v397, 120
  %v548 = vpop.permute.xlu0 %547
  %549 = vrot.lane.b32.xlu0 %v394, 120
  %v550 = vpop.permute.xlu0 %549
  %551 = vrot.lane.b32.xlu0 %v396, 120
  %v552 = vpop.permute.xlu0 %551
  %553 = vrot.lane.b32.xlu0 %v398, 120
  %v554 = vpop.permute.xlu0 %553
  %v555 = vsel %vm169, %v544, %v550
  %v556 = vsel %vm169, %v546, %v552
  %v557 = vsel %vm169, %v548, %v554
  %v558 = vsel %vm169, %v550, %v544
  %v559 = vsel %vm169, %v552, %v546
  %v560 = vsel %vm169, %v554, %v548
  %v561 = vmul.f32 %v555, %v172
  %v562 = vmul.f32 %v558, %v173
  %v563 = vmul.f32 %v556, %v172
  %v564 = vmul.f32 %v559, %v173
  %v565 = vmul.f32 %v557, %v172
  %v566 = vmul.f32 %v560, %v173
  %567 = vrot.lane.b32.xlu0 %v393, 119
  %v568 = vpop.permute.xlu0 %567
  %569 = vrot.lane.b32.xlu0 %v395, 119
  %v570 = vpop.permute.xlu0 %569
  %571 = vrot.lane.b32.xlu0 %v397, 119
  %v572 = vpop.permute.xlu0 %571
  %573 = vrot.lane.b32.xlu0 %v394, 119
  %v574 = vpop.permute.xlu0 %573
  %575 = vrot.lane.b32.xlu0 %v396, 119
  %v576 = vpop.permute.xlu0 %575
  %577 = vrot.lane.b32.xlu0 %v398, 119
  %v578 = vpop.permute.xlu0 %577
  %v579 = vsel %vm180, %v568, %v574
  %v580 = vsel %vm180, %v570, %v576
  %v581 = vsel %vm180, %v572, %v578
  %v582 = vsel %vm180, %v574, %v568
  %v583 = vsel %vm180, %v576, %v570
  %v584 = vsel %vm180, %v578, %v572
  %v585 = vmul.f32 %v579, %v183
  %v586 = vmul.f32 %v582, %v184
  %v587 = vmul.f32 %v580, %v183
  %v588 = vmul.f32 %v583, %v184
  %v589 = vmul.f32 %v581, %v183
  %v590 = vmul.f32 %v584, %v184
  %v591 = vld [vmem:[%s6] sm:$0xff]
  %v592 = vld [vmem:[%s6 + $0x8] sm:$0xff]
  %v593 = vld [vmem:[%s6 + $0x10] sm:$0xff]
  %v594 = vld [vmem:[%s6 + $0x18] sm:$0xff]
  %v595 = vld [vmem:[%s7] sm:$0xff]
  %v596 = vld [vmem:[%s7 + $0x8] sm:$0xff]
  %598 = vset.pattern.permute.xlu0 0
  %599 = vperm.xlu0 %598, %v595
  %v600 = vpop.permute.xlu0 %599
  %603 = vset.pattern.permute.xlu0 0
  %604 = vperm.xlu0 %603, %v596
  %v605 = vpop.permute.xlu0 %604
  %vm607 = vcmask 719872
  %v609 = vsel %vm607, %v592, 0
  %v612 = vsel %vm607, %v594, 0
  %614 = vmatpush.msra.mxu0 %v513
  %615 = vmatpush.msra.mxu0 %v397
  %616 = vmatpush.msra.mxu0 %v395
  %617 = vmatpush.msra.mxu0 %v393
  %618 = vmatpush.msra.mxu0 %v493
  %619 = vmatpush.msra.mxu0 %v491
  %620 = vmatpush.msra.mxu0 %v489
  %621 = vmatpush.msra.mxu0 %v469
  %622 = vmatpush.msra.mxu0 %v467
  %623 = vmatpush.msra.mxu0 %v465
  %624 = vmatpush.msra.mxu0 %v445
  %625 = vmatpush.msra.mxu0 %v443
  %626 = vmatpush.msra.mxu0 %v441
  %627 = vmatpush.msra.mxu0 %v421
  %628 = vmatpush.msra.mxu0 %v419
  %629 = vmatpush.msra.mxu0 %v417
  %630 = vmatmul.f32.gmra.mxu0 %v591
  %v631 = vpop.f32.mrf.mxu0
  %v632 = vadd.f32 %v600, %v631
  %633 = vmatmul.f32.gmra.mxu0 %v593
  %v634 = vpop.f32.mrf.mxu0
  %v635 = vadd.f32 %v605, %v634
  %636 = vdwg.mxu0
  %637 = vmatpush.msra.mxu0 0.0
  %638 = vmatpush.msra.mxu0 0.0
  %639 = vmatpush.msra.mxu0 0.0
  %640 = vmatpush.msra.mxu0 0.0
  %641 = vmatpush.msra.mxu0 0.0
  %642 = vmatpush.msra.mxu0 %v589
  %643 = vmatpush.msra.mxu0 %v587
  %644 = vmatpush.msra.mxu0 %v585
  %645 = vmatpush.msra.mxu0 %v565
  %646 = vmatpush.msra.mxu0 %v563
  %647 = vmatpush.msra.mxu0 %v561
  %648 = vmatpush.msra.mxu0 %v541
  %649 = vmatpush.msra.mxu0 %v539
  %650 = vmatpush.msra.mxu0 %v537
  %651 = vmatpush.msra.mxu0 %v517
  %652 = vmatpush.msra.mxu0 %v515
  %653 = vmatmul.f32.gmra.mxu0 %v609
  %v654 = vpop.f32.mrf.mxu0
  %v655 = vadd.f32 %v632, %v654
  %656 = vmatmul.f32.gmra.mxu0 %v612
  %v657 = vpop.f32.mrf.mxu0
  %v658 = vadd.f32 %v635, %v657
  %659 = vdwg.mxu0
  %660 = vmatpush.msra.mxu0 %v514
  %661 = vmatpush.msra.mxu0 %v398
  %662 = vmatpush.msra.mxu0 %v396
  %663 = vmatpush.msra.mxu0 %v394
  %664 = vmatpush.msra.mxu0 %v494
  %665 = vmatpush.msra.mxu0 %v492
  %666 = vmatpush.msra.mxu0 %v490
  %667 = vmatpush.msra.mxu0 %v470
  %668 = vmatpush.msra.mxu0 %v468
  %669 = vmatpush.msra.mxu0 %v466
  %670 = vmatpush.msra.mxu0 %v446
  %671 = vmatpush.msra.mxu0 %v444
  %672 = vmatpush.msra.mxu0 %v442
  %673 = vmatpush.msra.mxu0 %v422
  %674 = vmatpush.msra.mxu0 %v420
  %675 = vmatpush.msra.mxu0 %v418
  %676 = vmatmul.f32.gmra.mxu0 %v591
  %v677 = vpop.f32.mrf.mxu0
  %v678 = vadd.f32 %v600, %v677
  %679 = vmatmul.f32.gmra.mxu0 %v593
  %v680 = vpop.f32.mrf.mxu0
  %v681 = vadd.f32 %v605, %v680
  %682 = vdwg.mxu0
  %683 = vmatpush.msra.mxu0 0.0
  %684 = vmatpush.msra.mxu0 0.0
  %685 = vmatpush.msra.mxu0 0.0
  %686 = vmatpush.msra.mxu0 0.0
  %687 = vmatpush.msra.mxu0 0.0
  %688 = vmatpush.msra.mxu0 %v590
  %689 = vmatpush.msra.mxu0 %v588
  %690 = vmatpush.msra.mxu0 %v586
  %691 = vmatpush.msra.mxu0 %v566
  %692 = vmatpush.msra.mxu0 %v564
  %693 = vmatpush.msra.mxu0 %v562
  %694 = vmatpush.msra.mxu0 %v542
  %695 = vmatpush.msra.mxu0 %v540
  %696 = vmatpush.msra.mxu0 %v538
  %697 = vmatpush.msra.mxu0 %v518
  %698 = vmatpush.msra.mxu0 %v516
  %699 = vmatmul.f32.gmra.mxu0 %v609
  %v700 = vpop.f32.mrf.mxu0
  %v701 = vadd.f32 %v678, %v700
  %702 = vmatmul.f32.gmra.mxu0 %v612
  %v703 = vpop.f32.mrf.mxu0
  %v704 = vadd.f32 %v681, %v703
  %705 = vdwg.mxu0
  %706 = vst [vmem:[%s10 + $0x30] sm:$0xff] %v655
  %707 = vst [vmem:[%s10 + $0x38] sm:$0xff] %v701
  %708 = vst [vmem:[%s10 + $0x40] sm:$0xff] %v658
  %709 = vst [vmem:[%s10 + $0x48] sm:$0xff] %v704
  // Predicated region
  $region42: #{forward.1} parent=0 // pred_check
    _
  $region43: #{forward.1} parent=0 // pred_check_branch
    %711 = sbr.rel (0) target = $region45
  $region44: #{forward.1} parent=0 // pred_region
    _
  $region45: #{forward.1} parent=0 // pred_fallthru
    _
  // Predicated region
  $region46: #{forward.1} parent=0 // pred_check
    _
  $region47: #{forward.1} parent=0 // pred_check_branch
    %713 = sbr.rel (0) target = $region49
  $region48: #{forward.1} parent=0 // pred_region
    _
  $region49: #{forward.1} parent=0 // pred_fallthru
    _

</llo_original>
